<compile_context>
chip_gen: v5e
topology: v5e:2x2
jax: 0.10.0
libtpu: 0.0.40
codegen_flags: <defaults>
</compile_context>

<pallas_src>
import functools
import math

import jax
import jax.numpy as jnp
from jax import lax
from jax.experimental import pallas as pl
from jax.experimental.pallas import tpu as pltpu


def _vmem_limit(double_buffered_bytes, single_buffered_bytes=0, headroom=8 << 20):
    total = 2 * double_buffered_bytes + single_buffered_bytes + headroom
    # Clamp so the request is valid on every generation (v7x: 64 MiB physical VMEM).
    return int(min(max(total, 16 << 20), 48 << 20))


# --------------------------------------------------------------------------- #
# Kernel 1: fused QKV projection ([B*S, H] x [H, 3H], bf16 MXU, f32 accum).    #
# --------------------------------------------------------------------------- #
def _qkv_proj_kernel(x_ref, w_ref, b_ref, q_ref, k_ref, v_ref):
    # x_ref: [tm, H] bf16, w_ref: [H, 3H] bf16, b_ref: [1, 3H] f32.
    qkv = jnp.dot(x_ref[...], w_ref[...],
                  preferred_element_type=jnp.float32) + b_ref[...]     # [tm, 3H] f32
    H = q_ref.shape[-1]
    # Static lane slices (multiples of 128 lanes at BERT-base H).  Q is pre-scaled
    # by 1/sqrt(head_dim) via the folded weight / bias.
    q_ref[...] = qkv[:, 0 * H:1 * H].astype(q_ref.dtype)
    k_ref[...] = qkv[:, 1 * H:2 * H].astype(k_ref.dtype)
    v_ref[...] = qkv[:, 2 * H:3 * H].astype(v_ref.dtype)


# --------------------------------------------------------------------------- #
# Kernel 2: flash-style multi-head attention (online softmax) + tanh.          #
# --------------------------------------------------------------------------- #
def _flash_mha_tanh_kernel(q_ref, k_ref, v_ref, o_ref, m_sc, l_sc, acc_sc, *,
                           num_heads):
    ki = pl.program_id(2)

    @pl.when(ki == 0)
    def _init():
        m_sc[...] = jnp.full(m_sc.shape, -jnp.inf, dtype=m_sc.dtype)
        l_sc[...] = jnp.zeros(l_sc.shape, dtype=l_sc.dtype)
        acc_sc[...] = jnp.zeros(acc_sc.shape, dtype=acc_sc.dtype)

    q = q_ref[...]                      # [tq, H] bf16 (pre-scaled by 1/sqrt(dh))
    k = k_ref[...]                      # [tk, H] bf16
    v = v_ref[...]                      # [tk, H] bf16
    H = q.shape[-1]
    dh = H // num_heads

    # Static per-head loop over lane slices: no [nh, S, dh] transposes / concats.
    for h in range(num_heads):
        sl = slice(h * dh, (h + 1) * dh)
        # scores = q_h @ k_h^T, bf16 MXU operands, f32 accumulation.  The additive
        # attention mask (zero_tensor in the torch wrapper) is all-zeros -> no-op.
        scores = lax.dot_general(q[:, sl], k[:, sl],
                                 (((1,), (1,)), ((), ())),
                                 preferred_element_type=jnp.float32)   # [tq, tk] f32
        m_prev = m_sc[h]                                               # [tq, 1]
        m_new = jnp.maximum(m_prev, jnp.max(scores, axis=-1, keepdims=True))
        alpha = jnp.exp(m_prev - m_new)                                # f32
        p = jnp.exp(scores - m_new)                                    # [tq, tk] f32
        l_sc[h] = alpha * l_sc[h] + jnp.sum(p, axis=-1, keepdims=True)
        acc_sc[:, sl] = alpha * acc_sc[:, sl] + jnp.dot(
            p.astype(jnp.bfloat16), v[:, sl],
            preferred_element_type=jnp.float32)                        # [tq, dh] f32
        m_sc[h] = m_new
        # TODO(synk): attention_probs dropout omitted (eval-mode identity).

    @pl.when(ki == pl.num_programs(2) - 1)
    def _finalize():
        # Normalize each head with an EUP reciprocal, then one full-width tanh +
        # store (lane-dense at BERT-base H = 768; toy H = 32 is a masked store).
        for h in range(num_heads):
            sl = slice(h * dh, (h + 1) * dh)
            acc_sc[:, sl] = acc_sc[:, sl] * pl.reciprocal(l_sc[h], approx=True)
        o_ref[...] = jnp.tanh(acc_sc[...]).astype(o_ref.dtype)


def self_attention(x, wq, bq, wk, bk, wv, bv, *, num_heads,
                   row_block=256, q_block=256, kv_block=256):
    """x: [B, S, H] float32. Weights [H, H] (in, out layout), biases [H]."""
    B, S, H = x.shape
    assert H % num_heads == 0
    dh = H // num_heads
    scale = 1.0 / math.sqrt(dh)

    # Host-side (free): fuse QKV into one [H, 3H] weight / [1, 3H] bias, fold the
    # 1/sqrt(dh) attention scale into the Q projection, cast MXU operands to bf16.
    wqkv = jnp.concatenate([wq * scale, wk, wv], axis=1).astype(jnp.bfloat16)  # [H, 3H]
    bqkv = jnp.concatenate([bq * scale, bk, bv]).reshape(1, 3 * H).astype(jnp.float32)
    x2d = x.reshape(B * S, H).astype(jnp.bfloat16)

    # --------------------- Kernel 1: fused QKV projection ---------------------
    n_rows = B * S
    tm = min(row_block, n_rows)
    assert n_rows % tm == 0, "B*S must divide the row block"
    row_spec = pl.BlockSpec((tm, H), lambda i: (i, 0))
    k1_tiles = tm * H * 2 + H * 3 * H * 2 + 3 * H * 4 + 3 * tm * H * 2

    q2d, k2d, v2d = pl.pallas_call(
        _qkv_proj_kernel,
        out_shape=(jax.ShapeDtypeStruct((n_rows, H), jnp.bfloat16),) * 3,
        grid=(n_rows // tm,),
        in_specs=[
            pl.BlockSpec((tm, H), lambda i: (i, 0)),        # x row block
            pl.BlockSpec((H, 3 * H), lambda i: (0, 0)),     # fused Wqkv (grid-invariant)
            pl.BlockSpec((1, 3 * H), lambda i: (0, 0)),     # fused bias
        ],
        out_specs=(row_spec, row_spec, row_spec),
        compiler_params=pltpu.CompilerParams(
            dimension_semantics=("parallel",),
            vmem_limit_bytes=_vmem_limit(k1_tiles)),
        cost_estimate=pl.CostEstimate(
            flops=int(2 * n_rows * H * 3 * H),
            transcendentals=0,
            bytes_accessed=int(2 * n_rows * H + 2 * H * 3 * H + 4 * 3 * H
                               + 3 * 2 * n_rows * H)),
    )(x2d, wqkv, bqkv)

    q3 = q2d.reshape(B, S, H)
    k3 = k2d.reshape(B, S, H)
    v3 = v2d.reshape(B, S, H)

    # ------------- Kernel 2: flash attention (online softmax) + tanh ----------
    tq = min(q_block, S)
    tk = min(kv_block, S)
    assert S % tq == 0 and S % tk == 0, "seq len must divide the q/kv tiles"
    n_q, n_kv = S // tq, S // tk

    q_spec = pl.BlockSpec((None, tq, H), lambda b, qi, ki: (b, qi, 0))
    kv_spec = pl.BlockSpec((None, tk, H), lambda b, qi, ki: (b, ki, 0))

    k2_tiles = tq * H * 2 + 2 * tk * H * 2 + tq * H * 4
    k2_scratch = 2 * num_heads * tq * 128 * 4 + tq * H * 4

    flops = 4 * B * S * S * H
    transcendentals = B * num_heads * S * S + B * S * H
    bytes_accessed = 2 * B * S * H * (1 + 2 * n_q) + 4 * B * S * H

    return pl.pallas_call(
        functools.partial(_flash_mha_tanh_kernel, num_heads=num_heads),
        out_shape=jax.ShapeDtypeStruct((B, S, H), x.dtype),
        grid=(B, n_q, n_kv),
        in_specs=[q_spec, kv_spec, kv_spec],
        out_specs=pl.BlockSpec((None, tq, H), lambda b, qi, ki: (b, qi, 0)),
        scratch_shapes=[
            pltpu.VMEM((num_heads, tq, 1), jnp.float32),    # running max
            pltpu.VMEM((num_heads, tq, 1), jnp.float32),    # running sum
            pltpu.VMEM((tq, H), jnp.float32),               # f32 output accumulator
        ],
        compiler_params=pltpu.CompilerParams(
            dimension_semantics=("parallel", "parallel", "arbitrary"),
            vmem_limit_bytes=_vmem_limit(k2_tiles, k2_scratch)),
        cost_estimate=pl.CostEstimate(
            flops=int(flops),
            transcendentals=int(transcendentals),
            bytes_accessed=int(bytes_accessed)),
    )(q3, k3, v3)


def _reference(x, wq, bq, wk, bk, wv, bv, num_heads):
    """Pure-JAX f32 reference mirroring BertSelfAttention + tanh."""
    B, S, H = x.shape
    dh = H // num_heads
    q = x @ wq + bq
    k = x @ wk + bk
    v = x @ wv + bv

    def split(t):  # [B, S, H] -> [B, nh, S, dh]
        return t.reshape(B, S, num_heads, dh).transpose(0, 2, 1, 3)

    qh, kh, vh = split(q), split(k), split(v)
    scores = jnp.einsum("bhqd,bhkd->bhqk", qh, kh) / (dh ** 0.5)
    probs = jax.nn.softmax(scores, axis=-1)
    ctx = jnp.einsum("bhqk,bhkd->bhqd", probs, vh)
    ctx = ctx.transpose(0, 2, 1, 3).reshape(B, S, H)
    return jnp.tanh(ctx)


if __name__ == "__main__":
    # Small config consistent with BertSelfAttention: hidden=32, 4 heads, seq=8, batch=2.
    B, S, H, NH = 2, 8, 32, 4

    key = jax.random.PRNGKey(0)
    kx, kwq, kbq, kwk, kbk, kwv, kbv = jax.random.split(key, 7)

    x = jax.random.normal(kx, (B, S, H), dtype=jnp.float32)
    wscale = 0.05
    wq = wscale * jax.random.normal(kwq, (H, H), dtype=jnp.float32)
    bq = wscale * jax.random.normal(kbq, (H,), dtype=jnp.float32)
    wk = wscale * jax.random.normal(kwk, (H, H), dtype=jnp.float32)
    bk = wscale * jax.random.normal(kbk, (H,), dtype=jnp.float32)
    wv = wscale * jax.random.normal(kwv, (H, H), dtype=jnp.float32)
    bv = wscale * jax.random.normal(kbv, (H,), dtype=jnp.float32)

    out = self_attention(x, wq, bq, wk, bk, wv, bv, num_heads=NH)
    out = jax.block_until_ready(out)

    ref = _reference(x, wq, bq, wk, bk, wv, bv, NH)
    assert out.shape == (B, S, H)
    # Tolerance accounts for bf16 MXU operands and the approximate EUP reciprocal.
    assert jnp.allclose(out, ref, atol=2e-2, rtol=2e-2), "mismatch vs reference"

    print("KERNEL_OK")
</pallas_src>

<mosaic_0001>
module attributes {stable_mosaic.version = 11 : i64} {
  func.func @_qkv_proj_kernel(%arg0: i32, %arg1: memref<16x32xbf16, #tpu.memory_space<vmem>>, %arg2: memref<32x96xbf16, #tpu.memory_space<vmem>>, %arg3: memref<1x96xf32, #tpu.memory_space<vmem>>, %arg4: memref<16x32xbf16, #tpu.memory_space<vmem>>, %arg5: memref<16x32xbf16, #tpu.memory_space<vmem>>, %arg6: memref<16x32xbf16, #tpu.memory_space<vmem>>) attributes {dimension_semantics = [#tpu.dimension_semantics<parallel>], iteration_bounds = array<i64: 1>, scalar_prefetch = 0 : i64, scratch_operands = 0 : i64, tpu.core_type = #tpu.core_type<tc>, window_params = [{transform_indices = @transform_0, window_bounds = array<i64: 16, 32>}, {pipeline_mode = #tpu.pipeline_mode<synchronous>, transform_indices = @transform_1, window_bounds = array<i64: 32, 96>}, {pipeline_mode = #tpu.pipeline_mode<synchronous>, transform_indices = @transform_2, window_bounds = array<i64: 1, 96>}, {transform_indices = @transform_3, window_bounds = array<i64: 16, 32>}, {transform_indices = @transform_4, window_bounds = array<i64: 16, 32>}, {transform_indices = @transform_5, window_bounds = array<i64: 16, 32>}]} {
    %c0 = arith.constant 0 : index
    %c0_0 = arith.constant 0 : index
    %0 = vector.load %arg1[%c0, %c0_0] : memref<16x32xbf16, #tpu.memory_space<vmem>>, vector<16x32xbf16>
    %c0_1 = arith.constant 0 : index
    %c0_2 = arith.constant 0 : index
    %1 = vector.load %arg2[%c0_1, %c0_2] : memref<32x96xbf16, #tpu.memory_space<vmem>>, vector<32x96xbf16>
    %cst = arith.constant dense<0.000000e+00> : vector<16x96xf32>
    %2 = tpu.matmul %0, %1, %cst {dimension_numbers = #tpu.dot_dimension_numbers<[1], [0], [0], [1], [0, 0, 1, 1], [], []>} : vector<16x32xbf16>, vector<32x96xbf16>, vector<16x96xf32> -> vector<16x96xf32>
    %c0_3 = arith.constant 0 : index
    %c0_4 = arith.constant 0 : index
    %3 = vector.load %arg3[%c0_3, %c0_4] : memref<1x96xf32, #tpu.memory_space<vmem>>, vector<1x96xf32>
    %4 = vector.broadcast %3 : vector<1x96xf32> to vector<16x96xf32>
    %5 = arith.addf %2, %4 : vector<16x96xf32>
    %6 = vector.extract_strided_slice %5 {offsets = [0, 0], sizes = [16, 32], strides = [1, 1]} : vector<16x96xf32> to vector<16x32xf32>
    %7 = arith.truncf %6 : vector<16x32xf32> to vector<16x32xbf16>
    %c0_5 = arith.constant 0 : index
    %c0_6 = arith.constant 0 : index
    %8 = vector.load %arg4[%c0_5, %c0_6] : memref<16x32xbf16, #tpu.memory_space<vmem>>, vector<16x32xbf16>
    tpu.vector_store %arg4[%c0_5, %c0_6], %7 {strides = array<i32>} : memref<16x32xbf16, #tpu.memory_space<vmem>>, vector<16x32xbf16>,
    %9 = vector.extract_strided_slice %5 {offsets = [0, 32], sizes = [16, 32], strides = [1, 1]} : vector<16x96xf32> to vector<16x32xf32>
    %10 = arith.truncf %9 : vector<16x32xf32> to vector<16x32xbf16>
    %c0_7 = arith.constant 0 : index
    %c0_8 = arith.constant 0 : index
    %11 = vector.load %arg5[%c0_7, %c0_8] : memref<16x32xbf16, #tpu.memory_space<vmem>>, vector<16x32xbf16>
    tpu.vector_store %arg5[%c0_7, %c0_8], %10 {strides = array<i32>} : memref<16x32xbf16, #tpu.memory_space<vmem>>, vector<16x32xbf16>,
    %12 = vector.extract_strided_slice %5 {offsets = [0, 64], sizes = [16, 32], strides = [1, 1]} : vector<16x96xf32> to vector<16x32xf32>
    %13 = arith.truncf %12 : vector<16x32xf32> to vector<16x32xbf16>
    %c0_9 = arith.constant 0 : index
    %c0_10 = arith.constant 0 : index
    %14 = vector.load %arg6[%c0_9, %c0_10] : memref<16x32xbf16, #tpu.memory_space<vmem>>, vector<16x32xbf16>
    tpu.vector_store %arg6[%c0_9, %c0_10], %13 {strides = array<i32>} : memref<16x32xbf16, #tpu.memory_space<vmem>>, vector<16x32xbf16>,
    return
  }
  func.func @transform_0(%arg0: i32) -> (i32, i32) {
    %c0_i32 = arith.constant 0 : i32
    %c0_i32_0 = arith.constant 0 : i32
    return %arg0, %c0_i32 : i32, i32
  }
  func.func @transform_1(%arg0: i32) -> (i32, i32) {
    %c0_i32 = arith.constant 0 : i32
    %c0_i32_0 = arith.constant 0 : i32
    %c0_i32_1 = arith.constant 0 : i32
    return %c0_i32, %c0_i32_0 : i32, i32
  }
  func.func @transform_2(%arg0: i32) -> (i32, i32) {
    %c0_i32 = arith.constant 0 : i32
    %c0_i32_0 = arith.constant 0 : i32
    %c0_i32_1 = arith.constant 0 : i32
    return %c0_i32, %c0_i32_0 : i32, i32
  }
  func.func @transform_3(%arg0: i32) -> (i32, i32) {
    %c0_i32 = arith.constant 0 : i32
    %c0_i32_0 = arith.constant 0 : i32
    return %arg0, %c0_i32 : i32, i32
  }
  func.func @transform_4(%arg0: i32) -> (i32, i32) {
    %c0_i32 = arith.constant 0 : i32
    %c0_i32_0 = arith.constant 0 : i32
    return %arg0, %c0_i32 : i32, i32
  }
  func.func @transform_5(%arg0: i32) -> (i32, i32) {
    %c0_i32 = arith.constant 0 : i32
    %c0_i32_0 = arith.constant 0 : i32
    return %arg0, %c0_i32 : i32, i32
  }
}

</mosaic_0001>

<llo_original>
// kernel: tpu_custom_call.1
$region0: #{tpu_custom_call.1}
  #allocation0 [shape = 'u32[]', space=smem, size = 0x4, offset = 0x4, fixed_abs, tag = 'smem constant byte address 0x4 - core index']
  #allocation1 [shape = 'u32[72,128]{1,0:T(1,128)}', space=vmem, size = 0x9000, scoped, tag = 'internal scratch']
  %s0 = inlined_call_operand.hbm [shape: bf16[16,32], index: 0, kind: input, shape index: {}]
  %s1 = inlined_call_operand.hbm [shape: bf16[32,96], index: 1, kind: input, shape index: {}]
  %s2 = inlined_call_operand.vmem [shape: f32[1,96], index: 2, kind: input, shape index: {}]
  %s3 = inlined_call_operand.hbm [shape: bf16[16,32], index: 3, kind: output, shape index: {0}]
  %s4 = inlined_call_operand.hbm [shape: bf16[16,32], index: 4, kind: output, shape index: {1}]
  %s5 = inlined_call_operand.hbm [shape: bf16[16,32], index: 5, kind: output, shape index: {2}]
  %6 = xla_tuple %s3, %s4, %s5
  %s7 = sld [smem:[#allocation0]]
  $region46: #{tpu_custom_call.1} parent=0
    _
  %s9 = ssub.s32 1, %s7
  %s10 = scalar_select 0, %s9, %s7
  $region1: #{tpu_custom_call.1} parent=0
    #allocation2 [shape = 'u8[4096]{0}', space=vmem, size = 0x1000, scoped, tag = 'input window, operand 0, single buffered']
    #allocation3 [shape = 's32[1]{0}', space=sflag, size = 0x4, scoped, tag = 'scoped memory for tpu_custom_call.1']
    #allocation4 [shape = 's32[1]{0}', space=sflag, size = 0x4, scoped, tag = 'scoped memory for tpu_custom_call.1']
    #allocation5 [shape = 'u8[8192]{0}', space=vmem, size = 0x2000, scoped, tag = 'input window, operand 1, single buffered']
    #allocation6 [shape = 's32[1]{0}', space=sflag, size = 0x4, scoped, tag = 'scoped memory for tpu_custom_call.1']
    #allocation7 [shape = 'u8[4096]{0}', space=vmem, size = 0x1000, scoped, tag = 'output window, operand 0, single buffered']
    #allocation8 [shape = 'u8[4096]{0}', space=vmem, size = 0x1000, scoped, tag = 'output window, operand 1, single buffered']
    #allocation9 [shape = 's32[1]{0}', space=sflag, size = 0x4, scoped, tag = 'scoped memory for tpu_custom_call.1']
    #allocation10 [shape = 'u8[4096]{0}', space=vmem, size = 0x1000, scoped, tag = 'output window, operand 2, single buffered']
    %11 = vsyncpa [#allocation3], 0
    %12 = vsyncpa [#allocation6], 0
    %13 = vsyncpa [#allocation4], 0
    %14 = vsyncpa [#allocation9], 0
    // Predicated region
    $region2: #{tpu_custom_call.1} parent=1 // pred_check
      _
    $region3: #{tpu_custom_call.1} parent=1 // pred_check_branch
      %16 = sbr.rel (0) target = $region5
    $region4: #{tpu_custom_call.1} parent=1 // pred_region
      %18 = vsyncadd [#allocation3], 0
      %s19 = sshll.u32 %s0, 4
      %s20 = int_to_ptr.hbm [resolvable:$true] %s19
      %s21 = sshll.u32 [#allocation2], 4
      %s22 = int_to_ptr.vmem [resolvable:$true] %s21
      %27 = dma.hbm_to_vmem [thread:$0]  %s20, 128, %s22, [#allocation3], 64, 64, 4
    $region5: #{tpu_custom_call.1} parent=1 // pred_fallthru
      _
    // Predicated region
    $region6: #{tpu_custom_call.1} parent=1 // pred_check
      _
    $region7: #{tpu_custom_call.1} parent=1 // pred_check_branch
      %29 = sbr.rel (0) target = $region9
    $region8: #{tpu_custom_call.1} parent=1 // pred_region
      %31 = vsyncadd [#allocation6], 0
      %s32 = sshll.u32 %s1, 4
      %s33 = int_to_ptr.hbm [resolvable:$true] %s32
      %s34 = sshll.u32 [#allocation5], 4
      %s35 = int_to_ptr.vmem [resolvable:$true] %s34
      %40 = dma.hbm_to_vmem [thread:$0]  %s33, 256, %s35, [#allocation6], 64, 64, 4
    $region9: #{tpu_custom_call.1} parent=1 // pred_fallthru
      _
    // Predicated region
    $region10: #{tpu_custom_call.1} parent=1 // pred_check
      _
    $region11: #{tpu_custom_call.1} parent=1 // pred_check_branch
      %42 = sbr.rel (0) target = $region13
    $region12: #{tpu_custom_call.1} parent=1 // pred_region
      _
    $region13: #{tpu_custom_call.1} parent=1 // pred_fallthru
      _
    // Predicated region
    $region14: #{tpu_custom_call.1} parent=1 // pred_check
      _
    $region15: #{tpu_custom_call.1} parent=1 // pred_check_branch
      %44 = sbr.rel (0) target = $region17
    $region16: #{tpu_custom_call.1} parent=1 // pred_region
      %46 = dma.done [#allocation3], 128
    $region17: #{tpu_custom_call.1} parent=1 // pred_fallthru
      _
    // Predicated region
    $region18: #{tpu_custom_call.1} parent=1 // pred_check
      _
    $region19: #{tpu_custom_call.1} parent=1 // pred_check_branch
      %48 = sbr.rel (0) target = $region21
    $region20: #{tpu_custom_call.1} parent=1 // pred_region
      %50 = dma.done [#allocation6], 256
    $region21: #{tpu_custom_call.1} parent=1 // pred_fallthru
      _
    %v52 = vld [vmem:[#allocation2] sm:$0xf]
    %v53 = vld [vmem:[#allocation2 + $0x4] sm:$0xf]
    %v54 = vld [vmem:[#allocation5] sm:$0xf]
    %v55 = vld [vmem:[#allocation5 + $0x4] sm:$0xf]
    %v56 = vld [vmem:[#allocation5 + $0x8] sm:$0xf]
    %v57 = vld [vmem:[#allocation5 + $0xc] sm:$0xf]
    %v58 = vld [vmem:[%s2] sm:$0x1]
    %v60 = vperm.slane %v58, 0
    %v64 = vunpack.c.l.b16 %v52
    %v65 = vunpack.c.l.b16 %v53
    %v66 = vpack.c.b16 %v65, %v64
    %v71 = vunpack.c.l.b16 %v54
    %v72 = vunpack.c.l.b16 %v55
    %v73 = vunpack.c.l.b16 %v56
    %v74 = vunpack.c.l.b16 %v57
    %v75 = vpack.c.b16 %v72, %v71
    %v76 = vpack.c.b16 %v74, %v73
    %vm79 = vcmask 261120
    %v81 = vsel %vm79, %v66, 0
    %83 = vmatpush.bf16.msra.mxu0 0
    %84 = vmatpush.bf16.msra.mxu0 0
    %85 = vmatpush.bf16.msra.mxu0 0
    %86 = vmatpush.bf16.msra.mxu0 0
    %87 = vmatpush.bf16.msra.mxu0 0
    %88 = vmatpush.bf16.msra.mxu0 0
    %89 = vmatpush.bf16.msra.mxu0 %v76
    %90 = vmatpush.bf16.msra.mxu0 %v75
    %91 = vmatmul.bf16.gmra.mxu0 %v81
    %v92 = vpop.f32.mrf.mxu0
    %v93 = vadd.f32 %v60, %v92
    %v94 = vpop.f32.mrf.mxu0
    %v95 = vadd.f32 %v60, %v94
    %96 = vdwg.mxu0
    %v97 = vpack.c.bf16 %v93, %v93
    %v98 = vpack.c.bf16 %v95, %v95
    %vm99 = vcmask 257024
    %100 = vst.msk [vmem:[#allocation7] sm:$0xf] %vm99, %v97
    %101 = vst.msk [vmem:[#allocation7 + $0x4] sm:$0xf] %vm99, %v98
    %104 = vrot.lane.b32.xlu0 %v97, 96
    %v105 = vpop.permute.xlu0 %104
    %106 = vrot.lane.b32.xlu0 %v98, 96
    %v107 = vpop.permute.xlu0 %106
    %110 = vst.msk [vmem:[#allocation8] sm:$0xf] %vm99, %v105
    %111 = vst.msk [vmem:[#allocation8 + $0x4] sm:$0xf] %vm99, %v107
    %112 = vrot.lane.b32.xlu0 %v97, 64
    %v113 = vpop.permute.xlu0 %112
    %114 = vrot.lane.b32.xlu0 %v98, 64
    %v115 = vpop.permute.xlu0 %114
    %118 = vst.msk [vmem:[#allocation10] sm:$0xf] %vm99, %v113
    %119 = vst.msk [vmem:[#allocation10 + $0x4] sm:$0xf] %vm99, %v115
    // Predicated region
    $region22: #{tpu_custom_call.1} parent=1 // pred_check
      _
    $region23: #{tpu_custom_call.1} parent=1 // pred_check_branch
      %121 = sbr.rel (0) target = $region25
    $region24: #{tpu_custom_call.1} parent=1 // pred_region
      %123 = vsyncadd [#allocation4], 0
      %s124 = sshll.u32 [#allocation7], 4
      %s125 = int_to_ptr.vmem [resolvable:$true] %s124
      %s126 = sshll.u32 %s3, 4
      %s127 = int_to_ptr.hbm [resolvable:$true] %s126
      %132 = dma.vmem_to_hbm [thread:$0]  %s125, 128, %s127, [#allocation4], 64, 64, 4
    $region25: #{tpu_custom_call.1} parent=1 // pred_fallthru
      _
    // Predicated region
    $region26: #{tpu_custom_call.1} parent=1 // pred_check
      _
    $region27: #{tpu_custom_call.1} parent=1 // pred_check_branch
      %134 = sbr.rel (0) target = $region29
    $region28: #{tpu_custom_call.1} parent=1 // pred_region
      %136 = vsyncadd [#allocation9], 0
      %s137 = sshll.u32 [#allocation8], 4
      %s138 = int_to_ptr.vmem [resolvable:$true] %s137
      %s139 = sshll.u32 %s4, 4
      %s140 = int_to_ptr.hbm [resolvable:$true] %s139
      %145 = dma.vmem_to_hbm [thread:$0]  %s138, 128, %s140, [#allocation9], 64, 64, 4
    $region29: #{tpu_custom_call.1} parent=1 // pred_fallthru
      _
    // Predicated region
    $region30: #{tpu_custom_call.1} parent=1 // pred_check
      _
    $region31: #{tpu_custom_call.1} parent=1 // pred_check_branch
      %147 = sbr.rel (0) target = $region33
    $region32: #{tpu_custom_call.1} parent=1 // pred_region
      %149 = vsyncadd [#allocation9], 0
      %s150 = sshll.u32 [#allocation10], 4
      %s151 = int_to_ptr.vmem [resolvable:$true] %s150
      %s152 = sshll.u32 %s5, 4
      %s153 = int_to_ptr.hbm [resolvable:$true] %s152
      %158 = dma.vmem_to_hbm [thread:$0]  %s151, 128, %s153, [#allocation9], 64, 64, 4
    $region33: #{tpu_custom_call.1} parent=1 // pred_fallthru
      _
    // Predicated region
    $region34: #{tpu_custom_call.1} parent=1 // pred_check
      _
    $region35: #{tpu_custom_call.1} parent=1 // pred_check_branch
      %160 = sbr.rel (0) target = $region37
    $region36: #{tpu_custom_call.1} parent=1 // pred_region
      %162 = dma.done [#allocation4], 128
    $region37: #{tpu_custom_call.1} parent=1 // pred_fallthru
      _
    // Predicated region
    $region38: #{tpu_custom_call.1} parent=1 // pred_check
      _
    $region39: #{tpu_custom_call.1} parent=1 // pred_check_branch
      %164 = sbr.rel (0) target = $region41
    $region40: #{tpu_custom_call.1} parent=1 // pred_region
      %166 = dma.done [#allocation9], 128
    $region41: #{tpu_custom_call.1} parent=1 // pred_fallthru
      _
    // Predicated region
    $region42: #{tpu_custom_call.1} parent=1 // pred_check
      _
    $region43: #{tpu_custom_call.1} parent=1 // pred_check_branch
      %168 = sbr.rel (0) target = $region45
    $region44: #{tpu_custom_call.1} parent=1 // pred_region
      %170 = dma.done [#allocation9], 128
    $region45: #{tpu_custom_call.1} parent=1 // pred_fallthru
      _
    %171 = vsyncpa [#allocation3], 1
    %172 = vsyncpa [#allocation6], 1
    %173 = vsyncpa [#allocation4], 1
    %174 = vsyncpa [#allocation9], 1

</llo_original>
